<compile_context>
chip_gen: v6e
topology: v6e:2x2x1
jax: 0.10.0
libtpu: 0.0.40
codegen_flags: <defaults>
</compile_context>

<pallas_src>
import functools
import math

import jax
import jax.numpy as jnp
from jax.experimental import pallas as pl
from jax.experimental.pallas import tpu as pltpu

SELU_ALPHA = 1.6732632423543772
SELU_SCALE = 1.0507009873554805

_LANES = 128     # TPU vreg lane width
_SUBLANES = 8    # TPU vreg sublane count


def _round_up(n, m):
    return ((n + m - 1) // m) * m


def _selu(x):
    # scale * (x if x > 0 else alpha * (exp(x) - 1)); exp goes to the EUP slot.
    one = jnp.asarray(1.0, dtype=x.dtype)
    return SELU_SCALE * jnp.where(x > 0, x, SELU_ALPHA * (jnp.exp(x) - one))


def _sigmoid(x, approx):
    den = 1.0 + jnp.exp(-x)  # exp runs on the EUP
    if approx:
        # approximate reciprocal also runs on the EUP -> divide stays off the VALU
        return pl.reciprocal(den, approx=True)
    return 1.0 / den


def _snn_kernel(n_layers, approx_sigmoid, selu_bf16, *refs):
    """refs = (x_ref, w1, b1, ..., wL_t, bL, o_ref); one batch tile per grid step.

    Hidden layers run batch-on-sublanes:  h = selu(h @ W_i + b_i).
    The final Linear + Sigmoid is evaluated transposed (batch on the lane axis), so the
    (out_dim, tb) result is lane-dense and the HBM writeback is an unmasked dense store.
    AlphaDropout is identity at inference.
    """
    x_ref = refs[0]
    o_ref = refs[-1]
    params = refs[1:-1]

    h = x_ref[...]
    for layer in range(n_layers - 1):
        w = params[2 * layer][...]          # (d_in, d_out)
        b = params[2 * layer + 1][...]      # (1, d_out), f32
        # MXU matmul; accumulate in f32 regardless of operand dtype (f32 or bf16).
        h = jnp.dot(h.astype(w.dtype), w, preferred_element_type=jnp.float32) + b
        if selu_bf16:
            # v6e/v7x micro-opt: bf16 EUP packs 16x128 per vreg -> ~2x fewer EUP issues.
            h = h.astype(jnp.bfloat16)
        h = _selu(h)

    # Final Linear + Sigmoid, transposed:  z[o, r] = W_last[o, :] . h[r, :] + b[o]
    w = params[2 * (n_layers - 1)][...]     # (out_dim, d_hidden) == PyTorch (out, in)
    b = params[2 * (n_layers - 1) + 1][...]  # (out_dim, 1), f32
    z = jax.lax.dot_general(
        w, h.astype(w.dtype), (((1,), (1,)), ((), ())),
        preferred_element_type=jnp.float32)  # (out_dim, tb), batch on lanes
    z = z + b
    o_ref[...] = _sigmoid(z, approx_sigmoid).astype(o_ref.dtype)


def snn_forward(x, weights, biases, *, tile_rows=None, use_bf16=False,
                approx_sigmoid=False, selu_bf16=False):
    """x: (B, in_features) f32; weights[i]: (in_i, out_i); biases[i]: (1, out_i).

    Hidden weights are stored (in, out) so the kernel computes h @ W on the MXU; the
    final weight is transposed by this wrapper to PyTorch's native (out, in) layout so
    the last matmul produces a lane-dense (out_dim, tb) tile (batch on lanes).

    Flags:
      use_bf16      : stream x / weights as bf16 (f32 MXU accumulation). Recommended on
                      all generations including v5e (its MXU handles bf16 natively; only
                      its VPU/EUP lack bf16, and those paths stay f32 here).
      selu_bf16     : evaluate SELU in bf16 (v6e/v7x only — their EUP has bf16).
      approx_sigmoid: EUP approximate reciprocal for the sigmoid denominator; not
                      bit-exact vs jax.nn.sigmoid (error ~1e-4 relative).
    """
    n_layers = len(weights)
    assert len(biases) == n_layers and n_layers >= 1
    B, in_features = x.shape
    out_dim = weights[-1].shape[1]

    # --- parameter layout: hidden (in, out); final transposed to (out, in); biases f32.
    w_last_t = jnp.asarray(weights[-1]).T          # (out_dim, n_hidden)
    b_last_t = jnp.asarray(biases[-1]).T           # (out_dim, 1)
    ws = [jnp.asarray(w) for w in weights[:-1]] + [w_last_t]
    bs = ([jnp.asarray(b).astype(jnp.float32) for b in biases[:-1]]
          + [b_last_t.astype(jnp.float32)])

    if use_bf16:
        x_in = x.astype(jnp.bfloat16)
        ws = [w.astype(jnp.bfloat16) for w in ws]
    else:
        x_in = x.astype(jnp.float32)
        ws = [w.astype(jnp.float32) for w in ws]

    # --- batch tiling ----------------------------------------------------------------
    # Per-row VMEM cost at these widths is ~1 KB (double-buffered x tile + f32
    # intermediates + lane-packed out), so 2048-row tiles are ~2 MiB of tile state:
    # large enough to amortize the ~0.35 us per-grid-step overhead and approach the HBM
    # roofline, tiny vs 128 MiB (v5e/v6e) and 64 MiB (v7x) VMEM.
    if tile_rows is None:
        tile_rows = 2048
    tile_rows = max(int(tile_rows), 1)
    if B >= 2 * tile_rows:
        # Already >= 2 grid steps at the requested tile size.
        tb = _round_up(tile_rows, _LANES)
    elif B >= 2 * _LANES:
        # Force >= 2 grid steps so the ("parallel",) batch axis can shard across v7x's
        # two TensorCores (neutral on v5e/v6e, which have a single TC).
        tb = _round_up(pl.cdiv(B, 2), _LANES)
    else:
        tb = B          # single block equal to the full array (no alignment needed)
    if tb >= B:
        tb = B
    # Multi-step tiles are multiples of 128 rows so the transposed (out_dim, tb) output
    # block stays lane-dense and the (tb, in) x block stays sublane-aligned.
    grid = (pl.cdiv(B, tb),)

    # --- specs: x / out move with the grid; weights & biases are grid-invariant --------
    inputs = [x_in]
    in_specs = [pl.BlockSpec((tb, in_features), lambda i: (i, 0))]
    for w, b in zip(ws, bs):
        inputs.append(w)
        inputs.append(b)
        # Constant index_map -> fetched once, VMEM-resident across all grid steps.
        in_specs.append(pl.BlockSpec(w.shape, lambda i: (0, 0)))
        in_specs.append(pl.BlockSpec(b.shape, lambda i: (0, 0)))
    out_specs = pl.BlockSpec((out_dim, tb), lambda i: (0, i))

    # --- VMEM budget (explicit, with headroom; capped at 48 MiB so v7x keeps scratch) --
    bpe_in = 2 if use_bf16 else 4
    param_bytes = (sum(w.size * bpe_in for w in ws) + sum(b.size * 4 for b in bs))
    max_width = max([in_features, out_dim] + [int(w.shape[1]) for w in ws[:-1]])
    tile_bytes = (2 * tb * in_features * bpe_in      # double-buffered x tiles
                  + 2 * out_dim * tb * 4             # double-buffered lane-packed out
                  + 6 * tb * max_width * 4)          # f32 intermediates / spill headroom
    vmem_limit = int(2 * param_bytes + tile_bytes) + (4 << 20)
    vmem_limit = min(max(vmem_limit, 16 << 20), 48 << 20)

    # --- scheduler hint (reflects the real, unpadded traffic) --------------------------
    flops = 2 * B * sum(int(w.shape[0]) * int(w.shape[1]) for w in weights)
    transcendentals = B * (sum(int(w.shape[1]) for w in weights[:-1]) + out_dim)
    bytes_accessed = B * in_features * bpe_in + param_bytes + B * out_dim * 4
    cost = pl.CostEstimate(flops=flops, transcendentals=transcendentals,
                           bytes_accessed=bytes_accessed)

    kernel = functools.partial(_snn_kernel, n_layers, approx_sigmoid, selu_bf16)

    out_t = pl.pallas_call(
        kernel,
        out_shape=jax.ShapeDtypeStruct((out_dim, B), jnp.float32),
        grid=grid,
        in_specs=in_specs,
        out_specs=out_specs,
        compiler_params=pltpu.CompilerParams(
            dimension_semantics=("parallel",),   # independent batch tiles (v7x megacore)
            vmem_limit_bytes=vmem_limit,
        ),
        cost_estimate=cost,
    )(*inputs)

    # (out_dim, B) -> (B, out_dim); for out_dim == 1 this is just a cheap reshape.
    return out_t.T


def init_snn_params(key, in_features, n_hidden, n_layers):
    """Matches the PyTorch __init__:
       weights ~ kaiming_normal(mode='fan_in', nonlinearity='linear') -> N(0, 1/fan_in)
       biases  = 0
    Weights are stored as (in, out); snn_forward transposes the last one internally."""
    dims = [in_features] + [n_hidden] * (n_layers - 1) + [1]
    weights, biases = [], []
    for i in range(n_layers):
        fan_in, fan_out = dims[i], dims[i + 1]
        key, sub = jax.random.split(key)
        std = 1.0 / math.sqrt(fan_in)
        w = jax.random.normal(sub, (fan_in, fan_out), dtype=jnp.float32) * std
        b = jnp.zeros((1, fan_out), dtype=jnp.float32)
        weights.append(w)
        biases.append(b)
    return weights, biases


def snn_reference(x, weights, biases):
    """Pure-JAX reference for the same forward pass."""
    h = x
    n_layers = len(weights)
    for i, (w, b) in enumerate(zip(weights, biases)):
        h = h @ w + b
        if i < n_layers - 1:
            h = SELU_SCALE * jnp.where(h > 0.0, h, SELU_ALPHA * jnp.expm1(h))
        else:
            h = jax.nn.sigmoid(h)
    return h


if __name__ == "__main__":
    # Small shapes consistent with the module: MLP on flat features.
    batch = 256
    in_features = 16
    n_hidden = 32
    n_layers = 3        # Linear(16->32), Linear(32->32), Linear(32->1)
    # p_dropout only affects training.
    # TODO(synk): AlphaDropout training-mode noise is not implemented (inference semantics only).

    key = jax.random.PRNGKey(0)
    key, xkey = jax.random.split(key)
    x = jax.random.normal(xkey, (batch, in_features), dtype=jnp.float32)

    weights, biases = init_snn_params(key, in_features, n_hidden, n_layers)
    with jax.default_matmul_precision("highest"):
        ref = snn_reference(x, weights, biases)

    # f32 path (exact sigmoid); default tiling gives a 2-step batch grid at B=256.
    out = snn_forward(x, weights, biases)
    out = jax.block_until_ready(out)
    assert out.shape == (batch, 1), out.shape
    assert jnp.allclose(out, ref, atol=2e-3, rtol=2e-3), \
        float(jnp.max(jnp.abs(out - ref)))

    # bf16 x/weights (halved HBM traffic), bf16 SELU, approximate-reciprocal sigmoid.
    out_fast = snn_forward(x, weights, biases, tile_rows=64, use_bf16=True,
                           approx_sigmoid=True, selu_bf16=True)
    out_fast = jax.block_until_ready(out_fast)
    assert out_fast.shape == (batch, 1), out_fast.shape
    assert jnp.allclose(out_fast, ref, atol=3e-2, rtol=3e-2), \
        float(jnp.max(jnp.abs(out_fast - ref)))

    print("KERNEL_OK")
</pallas_src>

<mosaic_0001>
module attributes {stable_mosaic.version = 11 : i64} {
  func.func @_snn_kernel(%arg0: i32, %arg1: memref<128x16xf32, #tpu.memory_space<vmem>>, %arg2: memref<16x32xf32, #tpu.memory_space<vmem>>, %arg3: memref<1x32xf32, #tpu.memory_space<vmem>>, %arg4: memref<32x32xf32, #tpu.memory_space<vmem>>, %arg5: memref<1x32xf32, #tpu.memory_space<vmem>>, %arg6: memref<1x32xf32, #tpu.memory_space<vmem>>, %arg7: memref<1x1xf32, #tpu.memory_space<vmem>>, %arg8: memref<1x128xf32, #tpu.memory_space<vmem>>) attributes {dimension_semantics = [#tpu.dimension_semantics<parallel>], iteration_bounds = array<i64: 2>, scalar_prefetch = 0 : i64, scratch_operands = 0 : i64, tpu.core_type = #tpu.core_type<tc>, window_params = [{transform_indices = @transform_0, window_bounds = array<i64: 128, 16>}, {pipeline_mode = #tpu.pipeline_mode<synchronous>, transform_indices = @transform_1, window_bounds = array<i64: 16, 32>}, {pipeline_mode = #tpu.pipeline_mode<synchronous>, transform_indices = @transform_2, window_bounds = array<i64: 1, 32>}, {pipeline_mode = #tpu.pipeline_mode<synchronous>, transform_indices = @transform_3, window_bounds = array<i64: 32, 32>}, {pipeline_mode = #tpu.pipeline_mode<synchronous>, transform_indices = @transform_4, window_bounds = array<i64: 1, 32>}, {pipeline_mode = #tpu.pipeline_mode<synchronous>, transform_indices = @transform_5, window_bounds = array<i64: 1, 32>}, {pipeline_mode = #tpu.pipeline_mode<synchronous>, transform_indices = @transform_6, window_bounds = array<i64: 1, 1>}, {transform_indices = @transform_7, window_bounds = array<i64: 1, 128>}]} {
    %c0 = arith.constant 0 : index
    %c0_0 = arith.constant 0 : index
    %0 = vector.load %arg1[%c0, %c0_0] : memref<128x16xf32, #tpu.memory_space<vmem>>, vector<128x16xf32>
    %c0_1 = arith.constant 0 : index
    %c0_2 = arith.constant 0 : index
    %1 = vector.load %arg2[%c0_1, %c0_2] : memref<16x32xf32, #tpu.memory_space<vmem>>, vector<16x32xf32>
    %c0_3 = arith.constant 0 : index
    %c0_4 = arith.constant 0 : index
    %2 = vector.load %arg3[%c0_3, %c0_4] : memref<1x32xf32, #tpu.memory_space<vmem>>, vector<1x32xf32>
    %cst = arith.constant dense<0.000000e+00> : vector<128x32xf32>
    %3 = tpu.matmul %0, %1, %cst {dimension_numbers = #tpu.dot_dimension_numbers<[1], [0], [0], [1], [0, 0, 1, 1], [], []>} : vector<128x16xf32>, vector<16x32xf32>, vector<128x32xf32> -> vector<128x32xf32>
    %4 = vector.broadcast %2 : vector<1x32xf32> to vector<128x32xf32>
    %5 = arith.addf %3, %4 : vector<128x32xf32>
    %cst_5 = arith.constant 0.000000e+00 : f32
    %6 = vector.broadcast %cst_5 : f32 to vector<128x32xf32>
    %7 = arith.cmpf ogt, %5, %6 : vector<128x32xf32>
    %8 = math.exp %5 : vector<128x32xf32>
    %cst_6 = arith.constant 1.000000e+00 : f32
    %9 = vector.broadcast %cst_6 : f32 to vector<128x32xf32>
    %10 = arith.subf %8, %9 : vector<128x32xf32>
    %cst_7 = arith.constant 1.67326319 : f32
    %11 = vector.broadcast %cst_7 : f32 to vector<128x32xf32>
    %12 = arith.mulf %11, %10 : vector<128x32xf32>
    %13 = arith.select %7, %5, %12 : vector<128x32xi1>, vector<128x32xf32>
    %cst_8 = arith.constant 1.05070102 : f32
    %14 = vector.broadcast %cst_8 : f32 to vector<128x32xf32>
    %15 = arith.mulf %14, %13 : vector<128x32xf32>
    %c0_9 = arith.constant 0 : index
    %c0_10 = arith.constant 0 : index
    %16 = vector.load %arg4[%c0_9, %c0_10] : memref<32x32xf32, #tpu.memory_space<vmem>>, vector<32x32xf32>
    %c0_11 = arith.constant 0 : index
    %c0_12 = arith.constant 0 : index
    %17 = vector.load %arg5[%c0_11, %c0_12] : memref<1x32xf32, #tpu.memory_space<vmem>>, vector<1x32xf32>
    %cst_13 = arith.constant dense<0.000000e+00> : vector<128x32xf32>
    %18 = tpu.matmul %15, %16, %cst_13 {dimension_numbers = #tpu.dot_dimension_numbers<[1], [0], [0], [1], [0, 0, 1, 1], [], []>} : vector<128x32xf32>, vector<32x32xf32>, vector<128x32xf32> -> vector<128x32xf32>
    %19 = vector.broadcast %17 : vector<1x32xf32> to vector<128x32xf32>
    %20 = arith.addf %18, %19 : vector<128x32xf32>
    %cst_14 = arith.constant 0.000000e+00 : f32
    %21 = vector.broadcast %cst_14 : f32 to vector<128x32xf32>
    %22 = arith.cmpf ogt, %20, %21 : vector<128x32xf32>
    %23 = math.exp %20 : vector<128x32xf32>
    %cst_15 = arith.constant 1.000000e+00 : f32
    %24 = vector.broadcast %cst_15 : f32 to vector<128x32xf32>
    %25 = arith.subf %23, %24 : vector<128x32xf32>
    %cst_16 = arith.constant 1.67326319 : f32
    %26 = vector.broadcast %cst_16 : f32 to vector<128x32xf32>
    %27 = arith.mulf %26, %25 : vector<128x32xf32>
    %28 = arith.select %22, %20, %27 : vector<128x32xi1>, vector<128x32xf32>
    %cst_17 = arith.constant 1.05070102 : f32
    %29 = vector.broadcast %cst_17 : f32 to vector<128x32xf32>
    %30 = arith.mulf %29, %28 : vector<128x32xf32>
    %c0_18 = arith.constant 0 : index
    %c0_19 = arith.constant 0 : index
    %31 = vector.load %arg6[%c0_18, %c0_19] : memref<1x32xf32, #tpu.memory_space<vmem>>, vector<1x32xf32>
    %c0_20 = arith.constant 0 : index
    %c0_21 = arith.constant 0 : index
    %32 = vector.load %arg7[%c0_20, %c0_21] : memref<1x1xf32, #tpu.memory_space<vmem>>, vector<1x1xf32>
    %cst_22 = arith.constant dense<0.000000e+00> : vector<1x128xf32>
    %33 = tpu.matmul %31, %30, %cst_22 {dimension_numbers = #tpu.dot_dimension_numbers<[1], [1], [0], [0], [0, 0, 1, 0], [], []>} : vector<1x32xf32>, vector<128x32xf32>, vector<1x128xf32> -> vector<1x128xf32>
    %34 = vector.broadcast %32 : vector<1x1xf32> to vector<1x128xf32>
    %35 = arith.addf %33, %34 : vector<1x128xf32>
    %cst_23 = arith.constant 0.000000e+00 : f32
    %36 = vector.broadcast %cst_23 : f32 to vector<1x128xf32>
    %37 = arith.subf %36, %35 : vector<1x128xf32>
    %38 = math.exp %37 : vector<1x128xf32>
    %cst_24 = arith.constant 1.000000e+00 : f32
    %39 = vector.broadcast %cst_24 : f32 to vector<1x128xf32>
    %40 = arith.addf %39, %38 : vector<1x128xf32>
    %cst_25 = arith.constant 1.000000e+00 : f32
    %41 = vector.broadcast %cst_25 : f32 to vector<1x128xf32>
    %42 = arith.divf %41, %40 : vector<1x128xf32>
    %c0_26 = arith.constant 0 : index
    %c0_27 = arith.constant 0 : index
    %43 = vector.load %arg8[%c0_26, %c0_27] : memref<1x128xf32, #tpu.memory_space<vmem>>, vector<1x128xf32>
    tpu.vector_store %arg8[%c0_26, %c0_27], %42 {strides = array<i32>} : memref<1x128xf32, #tpu.memory_space<vmem>>, vector<1x128xf32>,
    return
  }
  func.func @transform_0(%arg0: i32) -> (i32, i32) {
    %c0_i32 = arith.constant 0 : i32
    %c0_i32_0 = arith.constant 0 : i32
    return %arg0, %c0_i32 : i32, i32
  }
  func.func @transform_1(%arg0: i32) -> (i32, i32) {
    %c0_i32 = arith.constant 0 : i32
    %c0_i32_0 = arith.constant 0 : i32
    %c0_i32_1 = arith.constant 0 : i32
    return %c0_i32, %c0_i32_0 : i32, i32
  }
  func.func @transform_2(%arg0: i32) -> (i32, i32) {
    %c0_i32 = arith.constant 0 : i32
    %c0_i32_0 = arith.constant 0 : i32
    %c0_i32_1 = arith.constant 0 : i32
    return %c0_i32, %c0_i32_0 : i32, i32
  }
  func.func @transform_3(%arg0: i32) -> (i32, i32) {
    %c0_i32 = arith.constant 0 : i32
    %c0_i32_0 = arith.constant 0 : i32
    %c0_i32_1 = arith.constant 0 : i32
    return %c0_i32, %c0_i32_0 : i32, i32
  }
  func.func @transform_4(%arg0: i32) -> (i32, i32) {
    %c0_i32 = arith.constant 0 : i32
    %c0_i32_0 = arith.constant 0 : i32
    %c0_i32_1 = arith.constant 0 : i32
    return %c0_i32, %c0_i32_0 : i32, i32
  }
  func.func @transform_5(%arg0: i32) -> (i32, i32) {
    %c0_i32 = arith.constant 0 : i32
    %c0_i32_0 = arith.constant 0 : i32
    %c0_i32_1 = arith.constant 0 : i32
    return %c0_i32, %c0_i32_0 : i32, i32
  }
  func.func @transform_6(%arg0: i32) -> (i32, i32) {
    %c0_i32 = arith.constant 0 : i32
    %c0_i32_0 = arith.constant 0 : i32
    %c0_i32_1 = arith.constant 0 : i32
    return %c0_i32, %c0_i32_0 : i32, i32
  }
  func.func @transform_7(%arg0: i32) -> (i32, i32) {
    %c0_i32 = arith.constant 0 : i32
    %c0_i32_0 = arith.constant 0 : i32
    return %c0_i32, %arg0 : i32, i32
  }
}

</mosaic_0001>

<llo_original>
// kernel: tpu_custom_call.1
$region0: #{tpu_custom_call.1}
  #allocation0 [shape = 'u32[]', space=smem, size = 0x4, offset = 0x4, fixed_abs, tag = 'smem constant byte address 0x4 - core index']
  #allocation1 [shape = 'u32[144,128]{1,0:T(1,128)}', space=vmem, size = 0x12000, scoped, tag = 'internal scratch']
  #allocation2 [shape = 'f32[1,1]{1,0:T(1,128)S(1)}', space=vmem, size = 0x200, scoped, tag = 'scoped memory for tpu_custom_call.1']
  %s0 = inlined_call_operand.vmem [shape: f32[256,16], index: 0, kind: input, shape index: {}]
  %s1 = inlined_call_operand.vmem [shape: f32[16,32], index: 1, kind: input, shape index: {}]
  %s2 = inlined_call_operand.vmem [shape: f32[1,32], index: 2, kind: input, shape index: {}]
  %s3 = inlined_call_operand.vmem [shape: f32[32,32], index: 3, kind: input, shape index: {}]
  %s4 = inlined_call_operand.vmem [shape: f32[1,32], index: 4, kind: input, shape index: {}]
  %s5 = inlined_call_operand.vmem [shape: f32[1,32], index: 5, kind: input, shape index: {}]
  %s6 = inlined_call_operand.<no memory space> [shape: f32[1,1], index: 6, kind: input, shape index: {}]
  %s7 = inlined_call_operand.hbm [shape: f32[1,256], index: 7, kind: output, shape index: {}]
  %s8 = sld [smem:[#allocation0]]
  $region61: #{tpu_custom_call.1} parent=0
    _
  %s10 = ssub.s32 1, %s8
  %s11 = scalar_select 0, %s10, %s8
  %v12 = vstv %s6
  %13 = vst [vmem:[#allocation2] sm:$0x1] %v12
  $region1: #{tpu_custom_call.1} parent=0
    #allocation3 [shape = 'u8[1024]{0}', space=vmem, size = 0x400, scoped, tag = 'output window, operand 0']
    #allocation4 [shape = 's32[2]{0}', space=sflag, size = 0x8, scoped, tag = 'scoped memory for tpu_custom_call.1']
    %14 = vsyncpa [#allocation4], 0
    %s15 = scalar_lea.sflag [#allocation4], 1
    %16 = vsyncpa %s15, 0
    loop: start=0, step=1, limit=4
    $region2: #{tpu_custom_call.1} parent=1 // loop_pre_header
      _
    $region3: #{tpu_custom_call.1} parent=1 // loop_header
      %s18 = sphi 0, %s22
      %p19 = scmp.ge.s32.totalorder %s18, 4
      %s28 = sphi 0, %s30
      %s31 = sphi 0, %s28
      %s32 = sphi 0, %s31
      %s48 = sphi 0, %s32
      %s52 = sphi 0, %s52
      %s54 = sphi 0, %s52
      %s55 = sphi 0, %s54
      %s69 = sphi 0, %s55
      %s73 = sphi 0, %s73
      %s75 = sphi 0, %s73
      %s76 = sphi 0, %s75
      %s90 = sphi 0, %s76
      %s94 = sphi 0, %s94
      %s96 = sphi 0, %s94
      %s97 = sphi 0, %s96
      %s111 = sphi 0, %s97
      %s115 = sphi 0, %s115
      %s117 = sphi 0, %s115
      %s118 = sphi 0, %s117
      %s132 = sphi 0, %s118
      %s136 = sphi 0, %s136
      %s138 = sphi 0, %s136
      %s139 = sphi 0, %s138
      %s153 = sphi 0, %s139
      %s157 = sphi 0, %s157
      %s159 = sphi 0, %s157
      %s160 = sphi 0, %s159
      %s174 = sphi 0, %s160
      %s180 = sphi 0, %s182
      %s183 = sphi 0, %s180
      %s184 = sphi 0, %s183
      %s200 = sphi 0, %s184
    $region4: #{tpu_custom_call.1} parent=1 // loop_header_branch
      %21 = sbr.rel (%p19) target = $region8
    $region5: #{tpu_custom_call.1} parent=1 // loop_body
      %s23 = ssub.s32 %s18, 1
      %s24 = ssub.s32 %s18, 2
      %s25 = sadd.s32 %s18, 1
      %s26 = ssub.s32 %s18, %s25
      %p27 = scmp.eq.s32.totalorder %s26, 0
      %s29 = sadd.s32 %s28, 1
      %s30 = scalar_select %p27, %s28, %s29
      %p33 = pneg %p27
      %p34 = scmp.eq.s32.totalorder %s18, 1
      %p35 = por %p33, %p34
      %p36 = scmp.ne.s32.totalorder %s28, %s31
      %p37 = scmp.eq.s32.totalorder %s18, 0
      %p38 = por %p36, %p37
      %p39 = scmp.ne.s32.totalorder %s28, %s31
      %p40 = scmp.eq.s32.totalorder %s23, 1
      %p41 = por %p39, %p40
      %p42 = scmp.ne.s32.totalorder %s31, %s32
      %p43 = scmp.eq.s32.totalorder %s23, 0
      %p44 = por %p42, %p43
      %p45 = scmp.ne.s32.totalorder %s31, %s32
      %p46 = scmp.eq.s32.totalorder %s24, 1
      %p47 = por %p45, %p46
      %p49 = scmp.ne.s32.totalorder %s32, %s48
      %p50 = scmp.eq.s32.totalorder %s24, 0
      %p51 = por %p49, %p50
      %s53 = sadd.s32 %s52, 1
      %p56 = scmp.eq.s32.totalorder %s18, 1
      %p57 = scmp.ne.s32.totalorder %s52, %s54
      %p58 = scmp.eq.s32.totalorder %s18, 0
      %p59 = por %p57, %p58
      %p60 = scmp.ne.s32.totalorder %s52, %s54
      %p61 = scmp.eq.s32.totalorder %s23, 1
      %p62 = por %p60, %p61
      %p63 = scmp.ne.s32.totalorder %s54, %s55
      %p64 = scmp.eq.s32.totalorder %s23, 0
      %p65 = por %p63, %p64
      %p66 = scmp.ne.s32.totalorder %s54, %s55
      %p67 = scmp.eq.s32.totalorder %s24, 1
      %p68 = por %p66, %p67
      %p70 = scmp.ne.s32.totalorder %s55, %s69
      %p71 = scmp.eq.s32.totalorder %s24, 0
      %p72 = por %p70, %p71
      %s74 = sadd.s32 %s73, 1
      %p77 = scmp.eq.s32.totalorder %s18, 1
      %p78 = scmp.ne.s32.totalorder %s73, %s75
      %p79 = scmp.eq.s32.totalorder %s18, 0
      %p80 = por %p78, %p79
      %p81 = scmp.ne.s32.totalorder %s73, %s75
      %p82 = scmp.eq.s32.totalorder %s23, 1
      %p83 = por %p81, %p82
      %p84 = scmp.ne.s32.totalorder %s75, %s76
      %p85 = scmp.eq.s32.totalorder %s23, 0
      %p86 = por %p84, %p85
      %p87 = scmp.ne.s32.totalorder %s75, %s76
      %p88 = scmp.eq.s32.totalorder %s24, 1
      %p89 = por %p87, %p88
      %p91 = scmp.ne.s32.totalorder %s76, %s90
      %p92 = scmp.eq.s32.totalorder %s24, 0
      %p93 = por %p91, %p92
      %s95 = sadd.s32 %s94, 1
      %p98 = scmp.eq.s32.totalorder %s18, 1
      %p99 = scmp.ne.s32.totalorder %s94, %s96
      %p100 = scmp.eq.s32.totalorder %s18, 0
      %p101 = por %p99, %p100
      %p102 = scmp.ne.s32.totalorder %s94, %s96
      %p103 = scmp.eq.s32.totalorder %s23, 1
      %p104 = por %p102, %p103
      %p105 = scmp.ne.s32.totalorder %s96, %s97
      %p106 = scmp.eq.s32.totalorder %s23, 0
      %p107 = por %p105, %p106
      %p108 = scmp.ne.s32.totalorder %s96, %s97
      %p109 = scmp.eq.s32.totalorder %s24, 1
      %p110 = por %p108, %p109
      %p112 = scmp.ne.s32.totalorder %s97, %s111
      %p113 = scmp.eq.s32.totalorder %s24, 0
      %p114 = por %p112, %p113
      %s116 = sadd.s32 %s115, 1
      %p119 = scmp.eq.s32.totalorder %s18, 1
      %p120 = scmp.ne.s32.totalorder %s115, %s117
      %p121 = scmp.eq.s32.totalorder %s18, 0
      %p122 = por %p120, %p121
      %p123 = scmp.ne.s32.totalorder %s115, %s117
      %p124 = scmp.eq.s32.totalorder %s23, 1
      %p125 = por %p123, %p124
      %p126 = scmp.ne.s32.totalorder %s117, %s118
      %p127 = scmp.eq.s32.totalorder %s23, 0
      %p128 = por %p126, %p127
      %p129 = scmp.ne.s32.totalorder %s117, %s118
      %p130 = scmp.eq.s32.totalorder %s24, 1
      %p131 = por %p129, %p130
      %p133 = scmp.ne.s32.totalorder %s118, %s132
      %p134 = scmp.eq.s32.totalorder %s24, 0
      %p135 = por %p133, %p134
      %s137 = sadd.s32 %s136, 1
      %p140 = scmp.eq.s32.totalorder %s18, 1
      %p141 = scmp.ne.s32.totalorder %s136, %s138
      %p142 = scmp.eq.s32.totalorder %s18, 0
      %p143 = por %p141, %p142
      %p144 = scmp.ne.s32.totalorder %s136, %s138
      %p145 = scmp.eq.s32.totalorder %s23, 1
      %p146 = por %p144, %p145
      %p147 = scmp.ne.s32.totalorder %s138, %s139
      %p148 = scmp.eq.s32.totalorder %s23, 0
      %p149 = por %p147, %p148
      %p150 = scmp.ne.s32.totalorder %s138, %s139
      %p151 = scmp.eq.s32.totalorder %s24, 1
      %p152 = por %p150, %p151
      %p154 = scmp.ne.s32.totalorder %s139, %s153
      %p155 = scmp.eq.s32.totalorder %s24, 0
      %p156 = por %p154, %p155
      %s158 = sadd.s32 %s157, 1
      %p161 = scmp.eq.s32.totalorder %s18, 1
      %p162 = scmp.ne.s32.totalorder %s157, %s159
      %p163 = scmp.eq.s32.totalorder %s18, 0
      %p164 = por %p162, %p163
      %p165 = scmp.ne.s32.totalorder %s157, %s159
      %p166 = scmp.eq.s32.totalorder %s23, 1
      %p167 = por %p165, %p166
      %p168 = scmp.ne.s32.totalorder %s159, %s160
      %p169 = scmp.eq.s32.totalorder %s23, 0
      %p170 = por %p168, %p169
      %p171 = scmp.ne.s32.totalorder %s159, %s160
      %p172 = scmp.eq.s32.totalorder %s24, 1
      %p173 = por %p171, %p172
      %p175 = scmp.ne.s32.totalorder %s160, %s174
      %p176 = scmp.eq.s32.totalorder %s24, 0
      %p177 = por %p175, %p176
      %s178 = ssub.s32 %s18, %s25
      %p179 = scmp.eq.s32.totalorder %s178, 0
      %s181 = sadd.s32 %s180, 1
      %s182 = scalar_select %p179, %s180, %s181
      %p185 = pneg %p179
      %p186 = scmp.eq.s32.totalorder %s18, 1
      %p187 = por %p185, %p186
      %p188 = scmp.ne.s32.totalorder %s180, %s183
      %p189 = scmp.eq.s32.totalorder %s18, 0
      %p190 = por %p188, %p189
      %p191 = scmp.ne.s32.totalorder %s180, %s183
      %p192 = scmp.eq.s32.totalorder %s23, 1
      %p193 = por %p191, %p192
      %p194 = scmp.ne.s32.totalorder %s183, %s184
      %p195 = scmp.eq.s32.totalorder %s23, 0
      %p196 = por %p194, %p195
      %p197 = scmp.ne.s32.totalorder %s183, %s184
      %p198 = scmp.eq.s32.totalorder %s24, 1
      %p199 = por %p197, %p198
      %p201 = scmp.ne.s32.totalorder %s184, %s200
      %p202 = scmp.eq.s32.totalorder %s24, 0
      %p203 = por %p201, %p202
      %p204 = scmp.le.s32.totalorder 1, %s18
      %p205 = scmp.lt.s32.totalorder %s18, 3
      %p206 = pnand %p204, %p205
      %p207 = pneg %p206
      // Predicated region
      $region9: #{tpu_custom_call.1} parent=5 // pred_check
        _
      $region10: #{tpu_custom_call.1} parent=5 // pred_check_branch
        %209 = sbr.rel (%p206) target = $region12
      $region11: #{tpu_custom_call.1} parent=5 // pred_region
        %s210 = ssub.s32 %s18, 1
        // Predicated region
        $region13: #{tpu_custom_call.1} parent=11 // pred_check
          %p211 = pneg %p65
        $region14: #{tpu_custom_call.1} parent=11 // pred_check_branch
          %213 = sbr.rel (%p211) target = $region16
        $region15: #{tpu_custom_call.1} parent=11 // pred_region
          _
        $region16: #{tpu_custom_call.1} parent=11 // pred_fallthru
          _
        // Predicated region
        $region17: #{tpu_custom_call.1} parent=11 // pred_check
          %p214 = pneg %p86
        $region18: #{tpu_custom_call.1} parent=11 // pred_check_branch
          %216 = sbr.rel (%p214) target = $region20
        $region19: #{tpu_custom_call.1} parent=11 // pred_region
          _
        $region20: #{tpu_custom_call.1} parent=11 // pred_fallthru
          _
        // Predicated region
        $region21: #{tpu_custom_call.1} parent=11 // pred_check
          %p217 = pneg %p107
        $region22: #{tpu_custom_call.1} parent=11 // pred_check_branch
          %219 = sbr.rel (%p217) target = $region24
        $region23: #{tpu_custom_call.1} parent=11 // pred_region
          _
        $region24: #{tpu_custom_call.1} parent=11 // pred_fallthru
          _
        // Predicated region
        $region25: #{tpu_custom_call.1} parent=11 // pred_check
          %p220 = pneg %p128
        $region26: #{tpu_custom_call.1} parent=11 // pred_check_branch
          %222 = sbr.rel (%p220) target = $region28
        $region27: #{tpu_custom_call.1} parent=11 // pred_region
          _
        $region28: #{tpu_custom_call.1} parent=11 // pred_fallthru
          _
        // Predicated region
        $region29: #{tpu_custom_call.1} parent=11 // pred_check
          %p223 = pneg %p149
        $region30: #{tpu_custom_call.1} parent=11 // pred_check_branch
          %225 = sbr.rel (%p223) target = $region32
        $region31: #{tpu_custom_call.1} parent=11 // pred_region
          _
        $region32: #{tpu_custom_call.1} parent=11 // pred_fallthru
          _
        // Predicated region
        $region33: #{tpu_custom_call.1} parent=11 // pred_check
          %p226 = pneg %p170
        $region34: #{tpu_custom_call.1} parent=11 // pred_check_branch
          %228 = sbr.rel (%p226) target = $region36
        $region35: #{tpu_custom_call.1} parent=11 // pred_region
          _
        $region36: #{tpu_custom_call.1} parent=11 // pred_fallthru
          _
      $region12: #{tpu_custom_call.1} parent=5 // pred_fallthru
        _
      %p229 = scmp.lt.s32.totalorder %s18, 2
      // Predicated region
      $region37: #{tpu_custom_call.1} parent=5 // pred_check
        %p230 = pneg %p229
      $region38: #{tpu_custom_call.1} parent=5 // pred_check_branch
        %232 = sbr.rel (%p230) target = $region40
      $region39: #{tpu_custom_call.1} parent=5 // pred_region
        // Predicated region
        $region41: #{tpu_custom_call.1} parent=39 // pred_check
          %p233 = pneg %p38
        $region42: #{tpu_custom_call.1} parent=39 // pred_check_branch
          %235 = sbr.rel (%p233) target = $region44
        $region43: #{tpu_custom_call.1} parent=39 // pred_region
          %s236 = smul.u32 16, %s18
          %p237 = scmp.lt.s32.totalorder %s236, 31
          %s238 = scalar_select %p237, %s236, 31
          %s239 = smul.addr %s238, 8
          %s240 = scalar_lea.vmem %s0, %s239
          %s241 = smul.u32 16, %s18
        $region44: #{tpu_custom_call.1} parent=39 // pred_fallthru
          _
      $region40: #{tpu_custom_call.1} parent=5 // pred_fallthru
        _
      %p242 = scmp.le.s32.totalorder 1, %s18
      %p243 = scmp.lt.s32.totalorder %s18, 3
      %p244 = pnand %p242, %p243
      %p245 = pneg %p244
      // Predicated region
      $region45: #{tpu_custom_call.1} parent=5 // pred_check
        _
      $region46: #{tpu_custom_call.1} parent=5 // pred_check_branch
        %247 = sbr.rel (%p244) target = $region48
      $region47: #{tpu_custom_call.1} parent=5 // pred_region
        %s248 = ssub.s32 %s18, 1
        %s249 = smul.u32 16, %s23
        %p250 = scmp.lt.s32.totalorder %s249, 31
        %s251 = scalar_select %p250, %s249, 31
        %s252 = smul.addr %s251, 8
        %s253 = scalar_lea.vmem %s0, %s252
        %p254 = pneg %p44
        %p255 = pneg %p41
        %p256 = pneg %p65
        %p257 = pneg %p62
        %p258 = pneg %p86
        %p259 = pneg %p83
        %p260 = pneg %p107
        %p261 = pneg %p104
        %p262 = pneg %p128
        %p263 = pneg %p125
        %p264 = pneg %p149
        %p265 = pneg %p146
        %p266 = pneg %p170
        %p267 = pneg %p167
        %p268 = pneg %p196
        %p269 = pneg %p193
        %s270 = sand.u32 %s183, 1
        %s271 = scalar_lea.sflag [#allocation4], %s270
        %s272 = sand.u32 %s183, 1
        %s273 = scalar_lea.vmem [#allocation3], %s272
        %s274 = smul.u32 16, %s23
        %p275 = scmp.lt.s32.totalorder %s274, 31
        %s276 = scalar_select %p275, %s274, 31
        %s277 = smul.addr %s276, 8
        %s278 = scalar_lea.vmem %s0, %s277
        %s279 = smul.u32 16, %s23
        %v280 = vld [vmem:[%s278] sm:$0xff]
        %v281 = vld [vmem:[%s278 + $0x8] sm:$0xff]
        %v282 = vld [vmem:[%s278 + $0x10] sm:$0xff]
        %v283 = vld [vmem:[%s278 + $0x18] sm:$0xff]
        %v284 = vld [vmem:[%s278 + $0x20] sm:$0xff]
        %v285 = vld [vmem:[%s278 + $0x28] sm:$0xff]
        %v286 = vld [vmem:[%s278 + $0x30] sm:$0xff]
        %v287 = vld [vmem:[%s278 + $0x38] sm:$0xff]
        %v288 = vld [vmem:[%s278 + $0x40] sm:$0xff]
        %v289 = vld [vmem:[%s278 + $0x48] sm:$0xff]
        %v290 = vld [vmem:[%s278 + $0x50] sm:$0xff]
        %v291 = vld [vmem:[%s278 + $0x58] sm:$0xff]
        %v292 = vld [vmem:[%s278 + $0x60] sm:$0xff]
        %v293 = vld [vmem:[%s278 + $0x68] sm:$0xff]
        %v294 = vld [vmem:[%s278 + $0x70] sm:$0xff]
        %v295 = vld [vmem:[%s278 + $0x78] sm:$0xff]
        %v296 = vld [vmem:[%s1] sm:$0xff]
        %v297 = vld [vmem:[%s1 + $0x8] sm:$0xff]
        %v298 = vld [vmem:[%s2] sm:$0x1]
        %v300 = vlaneseq
        %v301 = vshrl.u32 %v300, 7
        %v302 = vsub.s32 0, %v301
        %v303 = vrot.slane %v298, %v302
        %vm305 = vcmask 130048
        %v307 = vsel %vm305, %v280, 0
        %v310 = vsel %vm305, %v281, 0
        %v313 = vsel %vm305, %v282, 0
        %v316 = vsel %vm305, %v283, 0
        %v319 = vsel %vm305, %v284, 0
        %v322 = vsel %vm305, %v285, 0
        %v325 = vsel %vm305, %v286, 0
        %v328 = vsel %vm305, %v287, 0
        %v331 = vsel %vm305, %v288, 0
        %v334 = vsel %vm305, %v289, 0
        %v337 = vsel %vm305, %v290, 0
        %v340 = vsel %vm305, %v291, 0
        %v343 = vsel %vm305, %v292, 0
        %v346 = vsel %vm305, %v293, 0
        %v349 = vsel %vm305, %v294, 0
        %v352 = vsel %vm305, %v295, 0
        %354 = vmatprep.subr.mxu0 0.0
        %355 = vmatpush1.msra.mxu0 0.0
        %356 = vmatprep.subr.mxu0 0.0
        %357 = vmatpush1.msra.mxu0 0.0
        %358 = vmatprep.subr.mxu0 0.0
        %359 = vmatpush1.msra.mxu0 0.0
        %360 = vmatprep.subr.mxu0 0.0
        %361 = vmatpush1.msra.mxu0 0.0
        %362 = vmatprep.subr.mxu0 0.0
        %363 = vmatpush1.msra.mxu0 0.0
        %364 = vmatprep.subr.mxu0 0.0
        %365 = vmatpush1.msra.mxu0 0.0
        %366 = vmatprep.subr.mxu0 0.0
        %367 = vmatpush1.msra.mxu0 0.0
        %368 = vmatprep.subr.mxu0 0.0
        %369 = vmatpush1.msra.mxu0 0.0
        %370 = vmatprep.subr.mxu0 0.0
        %371 = vmatpush1.msra.mxu0 0.0
        %372 = vmatprep.subr.mxu0 0.0
        %373 = vmatpush1.msra.mxu0 0.0
        %374 = vmatprep.subr.mxu0 0.0
        %375 = vmatpush1.msra.mxu0 0.0
        %376 = vmatprep.subr.mxu0 0.0
        %377 = vmatpush1.msra.mxu0 0.0
        %378 = vmatprep.subr.mxu0 0.0
        %379 = vmatpush1.msra.mxu0 0.0
        %380 = vmatprep.subr.mxu0 0.0
        %381 = vmatpush1.msra.mxu0 0.0
        %382 = vmatprep.subr.mxu0 0.0
        %383 = vmatpush1.msra.mxu0 %v297
        %384 = vmatprep.subr.mxu0 0.0
        %385 = vmatpush1.msra.mxu0 %v296
        %386 = vmatprep.subr.mxu0 0.0
        %387 = vmatpush2.msra.mxu0 0.0
        %388 = vmatprep.subr.mxu0 0.0
        %389 = vmatpush2.msra.mxu0 0.0
        %390 = vmatprep.subr.mxu0 0.0
        %391 = vmatpush2.msra.mxu0 0.0
        %392 = vmatprep.subr.mxu0 0.0
        %393 = vmatpush2.msra.mxu0 0.0
        %394 = vmatprep.subr.mxu0 0.0
        %395 = vmatpush2.msra.mxu0 0.0
        %396 = vmatprep.subr.mxu0 0.0
        %397 = vmatpush2.msra.mxu0 0.0
        %398 = vmatprep.subr.mxu0 0.0
        %399 = vmatpush2.msra.mxu0 0.0
        %400 = vmatprep.subr.mxu0 0.0
        %401 = vmatpush2.msra.mxu0 0.0
        %402 = vmatprep.subr.mxu0 0.0
        %403 = vmatpush2.msra.mxu0 0.0
        %404 = vmatprep.subr.mxu0 0.0
        %405 = vmatpush2.msra.mxu0 0.0
        %406 = vmatprep.subr.mxu0 0.0
        %407 = vmatpush2.msra.mxu0 0.0
        %408 = vmatprep.subr.mxu0 0.0
        %409 = vmatpush2.msra.mxu0 0.0
        %410 = vmatprep.subr.mxu0 0.0
        %411 = vmatpush2.msra.mxu0 0.0
        %412 = vmatprep.subr.mxu0 0.0
        %413 = vmatpush2.msra.mxu0 0.0
        %414 = vmatprep.subr.mxu0 0.0
        %415 = vmatpush2.msra.mxu0 0.0
        %416 = vmatprep.subr.mxu0 0.0
        %417 = vmatpush2.msra.mxu0 0.0
        %418 = vmatprep.mubr.f32.mxu0 0.0
        %419 = vmatmul.mubr.f32.gmra.mxu0 %v307
        %v420 = vpop.f32.mrf.mxu0
        %v421 = vadd.f32 %v303, %v420
        %v422 = vpop.f32.mrf.mxu0
        %423 = vmatprep.mubr.f32.mxu0 0.0
        %424 = vmatmul.mubr.f32.gmra.mxu0 %v310
        %v425 = vpop.f32.mrf.mxu0
        %v426 = vadd.f32 %v303, %v425
        %v427 = vpop.f32.mrf.mxu0
        %428 = vmatprep.mubr.f32.mxu0 0.0
        %429 = vmatmul.mubr.f32.gmra.mxu0 %v313
        %v430 = vpop.f32.mrf.mxu0
        %v431 = vadd.f32 %v303, %v430
        %v432 = vpop.f32.mrf.mxu0
        %433 = vmatprep.mubr.f32.mxu0 0.0
        %434 = vmatmul.mubr.f32.gmra.mxu0 %v316
        %v435 = vpop.f32.mrf.mxu0
        %v436 = vadd.f32 %v303, %v435
        %v437 = vpop.f32.mrf.mxu0
        %438 = vmatprep.mubr.f32.mxu0 0.0
        %439 = vmatmul.mubr.f32.gmra.mxu0 %v319
        %v440 = vpop.f32.mrf.mxu0
        %v441 = vadd.f32 %v303, %v440
        %v442 = vpop.f32.mrf.mxu0
        %443 = vmatprep.mubr.f32.mxu0 0.0
        %444 = vmatmul.mubr.f32.gmra.mxu0 %v322
        %v445 = vpop.f32.mrf.mxu0
        %v446 = vadd.f32 %v303, %v445
        %v447 = vpop.f32.mrf.mxu0
        %448 = vmatprep.mubr.f32.mxu0 0.0
        %449 = vmatmul.mubr.f32.gmra.mxu0 %v325
        %v450 = vpop.f32.mrf.mxu0
        %v451 = vadd.f32 %v303, %v450
        %v452 = vpop.f32.mrf.mxu0
        %453 = vmatprep.mubr.f32.mxu0 0.0
        %454 = vmatmul.mubr.f32.gmra.mxu0 %v328
        %v455 = vpop.f32.mrf.mxu0
        %v456 = vadd.f32 %v303, %v455
        %v457 = vpop.f32.mrf.mxu0
        %458 = vmatprep.mubr.f32.mxu0 0.0
        %459 = vmatmul.mubr.f32.gmra.mxu0 %v331
        %v460 = vpop.f32.mrf.mxu0
        %v461 = vadd.f32 %v303, %v460
        %v462 = vpop.f32.mrf.mxu0
        %463 = vmatprep.mubr.f32.mxu0 0.0
        %464 = vmatmul.mubr.f32.gmra.mxu0 %v334
        %v465 = vpop.f32.mrf.mxu0
        %v466 = vadd.f32 %v303, %v465
        %v467 = vpop.f32.mrf.mxu0
        %468 = vmatprep.mubr.f32.mxu0 0.0
        %469 = vmatmul.mubr.f32.gmra.mxu0 %v337
        %v470 = vpop.f32.mrf.mxu0
        %v471 = vadd.f32 %v303, %v470
        %v472 = vpop.f32.mrf.mxu0
        %473 = vmatprep.mubr.f32.mxu0 0.0
        %474 = vmatmul.mubr.f32.gmra.mxu0 %v340
        %v475 = vpop.f32.mrf.mxu0
        %v476 = vadd.f32 %v303, %v475
        %v477 = vpop.f32.mrf.mxu0
        %478 = vmatprep.mubr.f32.mxu0 0.0
        %479 = vmatmul.mubr.f32.gmra.mxu0 %v343
        %v480 = vpop.f32.mrf.mxu0
        %v481 = vadd.f32 %v303, %v480
        %v482 = vpop.f32.mrf.mxu0
        %483 = vmatprep.mubr.f32.mxu0 0.0
        %484 = vmatmul.mubr.f32.gmra.mxu0 %v346
        %v485 = vpop.f32.mrf.mxu0
        %v486 = vadd.f32 %v303, %v485
        %v487 = vpop.f32.mrf.mxu0
        %488 = vmatprep.mubr.f32.mxu0 0.0
        %489 = vmatmul.mubr.f32.gmra.mxu0 %v349
        %v490 = vpop.f32.mrf.mxu0
        %v491 = vadd.f32 %v303, %v490
        %v492 = vpop.f32.mrf.mxu0
        %493 = vmatprep.mubr.f32.mxu0 0.0
        %494 = vmatmul.mubr.f32.gmra.mxu0 %v352
        %v495 = vpop.f32.mrf.mxu0
        %v496 = vadd.f32 %v303, %v495
        %v497 = vpop.f32.mrf.mxu0
        %498 = vdwg.mxu0
        %vm499 = vcmp.gt.f32.partialorder %v421, 0.0
        %vm500 = vcmp.gt.f32.partialorder %v426, 0.0
        %vm501 = vcmp.gt.f32.partialorder %v431, 0.0
        %vm502 = vcmp.gt.f32.partialorder %v436, 0.0
        %vm503 = vcmp.gt.f32.partialorder %v441, 0.0
        %vm504 = vcmp.gt.f32.partialorder %v446, 0.0
        %vm505 = vcmp.gt.f32.partialorder %v451, 0.0
        %vm506 = vcmp.gt.f32.partialorder %v456, 0.0
        %vm507 = vcmp.gt.f32.partialorder %v461, 0.0
        %vm508 = vcmp.gt.f32.partialorder %v466, 0.0
        %vm509 = vcmp.gt.f32.partialorder %v471, 0.0
        %vm510 = vcmp.gt.f32.partialorder %v476, 0.0
        %vm511 = vcmp.gt.f32.partialorder %v481, 0.0
        %vm512 = vcmp.gt.f32.partialorder %v486, 0.0
        %vm513 = vcmp.gt.f32.partialorder %v491, 0.0
        %vm514 = vcmp.gt.f32.partialorder %v496, 0.0
        %v515 = vmul.f32 %v421, 1.442695
        %v516 = vpow.pop %v515
        %v517 = vmul.f32 %v426, 1.442695
        %v518 = vpow.pop %v517
        %v519 = vmul.f32 %v431, 1.442695
        %v520 = vpow.pop %v519
        %v521 = vmul.f32 %v436, 1.442695
        %v522 = vpow.pop %v521
        %v523 = vmul.f32 %v441, 1.442695
        %v524 = vpow.pop %v523
        %v525 = vmul.f32 %v446, 1.442695
        %v526 = vpow.pop %v525
        %v527 = vmul.f32 %v451, 1.442695
        %v528 = vpow.pop %v527
        %v529 = vmul.f32 %v456, 1.442695
        %v530 = vpow.pop %v529
        %v531 = vmul.f32 %v461, 1.442695
        %v532 = vpow.pop %v531
        %v533 = vmul.f32 %v466, 1.442695
        %v534 = vpow.pop %v533
        %v535 = vmul.f32 %v471, 1.442695
        %v536 = vpow.pop %v535
        %v537 = vmul.f32 %v476, 1.442695
        %v538 = vpow.pop %v537
        %v539 = vmul.f32 %v481, 1.442695
        %v540 = vpow.pop %v539
        %v541 = vmul.f32 %v486, 1.442695
        %v542 = vpow.pop %v541
        %v543 = vmul.f32 %v491, 1.442695
        %v544 = vpow.pop %v543
        %v545 = vmul.f32 %v496, 1.442695
        %v546 = vpow.pop %v545
        %v547 = vsub.f32 %v516, 1.0
        %v548 = vsub.f32 %v518, 1.0
        %v549 = vsub.f32 %v520, 1.0
        %v550 = vsub.f32 %v522, 1.0
        %v551 = vsub.f32 %v524, 1.0
        %v552 = vsub.f32 %v526, 1.0
        %v553 = vsub.f32 %v528, 1.0
        %v554 = vsub.f32 %v530, 1.0
        %v555 = vsub.f32 %v532, 1.0
        %v556 = vsub.f32 %v534, 1.0
        %v557 = vsub.f32 %v536, 1.0
        %v558 = vsub.f32 %v538, 1.0
        %v559 = vsub.f32 %v540, 1.0
        %v560 = vsub.f32 %v542, 1.0
        %v561 = vsub.f32 %v544, 1.0
        %v562 = vsub.f32 %v546, 1.0
        %v563 = vmul.f32 %v547, 1.6732632
        %v564 = vmul.f32 %v548, 1.6732632
        %v565 = vmul.f32 %v549, 1.6732632
        %v566 = vmul.f32 %v550, 1.6732632
        %v567 = vmul.f32 %v551, 1.6732632
        %v568 = vmul.f32 %v552, 1.6732632
        %v569 = vmul.f32 %v553, 1.6732632
        %v570 = vmul.f32 %v554, 1.6732632
        %v571 = vmul.f32 %v555, 1.6732632
        %v572 = vmul.f32 %v556, 1.6732632
        %v573 = vmul.f32 %v557, 1.6732632
        %v574 = vmul.f32 %v558, 1.6732632
        %v575 = vmul.f32 %v559, 1.6732632
        %v576 = vmul.f32 %v560, 1.6732632
        %v577 = vmul.f32 %v561, 1.6732632
        %v578 = vmul.f32 %v562, 1.6732632
        %v579 = vsel %vm499, %v421, %v563
        %v580 = vsel %vm500, %v426, %v564
        %v581 = vsel %vm501, %v431, %v565
        %v582 = vsel %vm502, %v436, %v566
        %v583 = vsel %vm503, %v441, %v567
        %v584 = vsel %vm504, %v446, %v568
        %v585 = vsel %vm505, %v451, %v569
        %v586 = vsel %vm506, %v456, %v570
        %v587 = vsel %vm507, %v461, %v571
        %v588 = vsel %vm508, %v466, %v572
        %v589 = vsel %vm509, %v471, %v573
        %v590 = vsel %vm510, %v476, %v574
        %v591 = vsel %vm511, %v481, %v575
        %v592 = vsel %vm512, %v486, %v576
        %v593 = vsel %vm513, %v491, %v577
        %v594 = vsel %vm514, %v496, %v578
        %v595 = vmul.f32 %v579, 1.050701
        %v596 = vmul.f32 %v580, 1.050701
        %v597 = vmul.f32 %v581, 1.050701
        %v598 = vmul.f32 %v582, 1.050701
        %v599 = vmul.f32 %v583, 1.050701
        %v600 = vmul.f32 %v584, 1.050701
        %v601 = vmul.f32 %v585, 1.050701
        %v602 = vmul.f32 %v586, 1.050701
        %v603 = vmul.f32 %v587, 1.050701
        %v604 = vmul.f32 %v588, 1.050701
        %v605 = vmul.f32 %v589, 1.050701
        %v606 = vmul.f32 %v590, 1.050701
        %v607 = vmul.f32 %v591, 1.050701
        %v608 = vmul.f32 %v592, 1.050701
        %v609 = vmul.f32 %v593, 1.050701
        %v610 = vmul.f32 %v594, 1.050701
        %v611 = vld [vmem:[%s3] sm:$0xff]
        %v612 = vld [vmem:[%s3 + $0x8] sm:$0xff]
        %v613 = vld [vmem:[%s3 + $0x10] sm:$0xff]
        %v614 = vld [vmem:[%s3 + $0x18] sm:$0xff]
        %v615 = vld [vmem:[%s4] sm:$0x1]
        %v617 = vlaneseq
        %v618 = vshrl.u32 %v617, 7
        %v619 = vsub.s32 0, %v618
        %v620 = vrot.slane %v615, %v619
        %vm622 = vcmask 261120
        %v624 = vsel %vm622, %v595, 0
        %v627 = vsel %vm622, %v596, 0
        %v630 = vsel %vm622, %v597, 0
        %v633 = vsel %vm622, %v598, 0
        %v636 = vsel %vm622, %v599, 0
        %v639 = vsel %vm622, %v600, 0
        %v642 = vsel %vm622, %v601, 0
        %v645 = vsel %vm622, %v602, 0
        %v648 = vsel %vm622, %v603, 0
        %v651 = vsel %vm622, %v604, 0
        %v654 = vsel %vm622, %v605, 0
        %v657 = vsel %vm622, %v606, 0
        %v660 = vsel %vm622, %v607, 0
        %v663 = vsel %vm622, %v608, 0
        %v666 = vsel %vm622, %v609, 0
        %v669 = vsel %vm622, %v610, 0
        %671 = vmatprep.subr.mxu0 0.0
        %672 = vmatpush1.msra.mxu0 0.0
        %673 = vmatprep.subr.mxu0 0.0
        %674 = vmatpush1.msra.mxu0 0.0
        %675 = vmatprep.subr.mxu0 0.0
        %676 = vmatpush1.msra.mxu0 0.0
        %677 = vmatprep.subr.mxu0 0.0
        %678 = vmatpush1.msra.mxu0 0.0
        %679 = vmatprep.subr.mxu0 0.0
        %680 = vmatpush1.msra.mxu0 0.0
        %681 = vmatprep.subr.mxu0 0.0
        %682 = vmatpush1.msra.mxu0 0.0
        %683 = vmatprep.subr.mxu0 0.0
        %684 = vmatpush1.msra.mxu0 0.0
        %685 = vmatprep.subr.mxu0 0.0
        %686 = vmatpush1.msra.mxu0 0.0
        %687 = vmatprep.subr.mxu0 0.0
        %688 = vmatpush1.msra.mxu0 0.0
        %689 = vmatprep.subr.mxu0 0.0
        %690 = vmatpush1.msra.mxu0 0.0
        %691 = vmatprep.subr.mxu0 0.0
        %692 = vmatpush1.msra.mxu0 0.0
        %693 = vmatprep.subr.mxu0 0.0
        %694 = vmatpush1.msra.mxu0 0.0
        %695 = vmatprep.subr.mxu0 0.0
        %696 = vmatpush1.msra.mxu0 %v614
        %697 = vmatprep.subr.mxu0 0.0
        %698 = vmatpush1.msra.mxu0 %v613
        %699 = vmatprep.subr.mxu0 0.0
        %700 = vmatpush1.msra.mxu0 %v612
        %701 = vmatprep.subr.mxu0 0.0
        %702 = vmatpush1.msra.mxu0 %v611
        %703 = vmatprep.subr.mxu0 0.0
        %704 = vmatpush2.msra.mxu0 0.0
        %705 = vmatprep.subr.mxu0 0.0
        %706 = vmatpush2.msra.mxu0 0.0
        %707 = vmatprep.subr.mxu0 0.0
        %708 = vmatpush2.msra.mxu0 0.0
        %709 = vmatprep.subr.mxu0 0.0
        %710 = vmatpush2.msra.mxu0 0.0
        %711 = vmatprep.subr.mxu0 0.0
        %712 = vmatpush2.msra.mxu0 0.0
        %713 = vmatprep.subr.mxu0 0.0
        %714 = vmatpush2.msra.mxu0 0.0
        %715 = vmatprep.subr.mxu0 0.0
        %716 = vmatpush2.msra.mxu0 0.0
        %717 = vmatprep.subr.mxu0 0.0
        %718 = vmatpush2.msra.mxu0 0.0
        %719 = vmatprep.subr.mxu0 0.0
        %720 = vmatpush2.msra.mxu0 0.0
        %721 = vmatprep.subr.mxu0 0.0
        %722 = vmatpush2.msra.mxu0 0.0
        %723 = vmatprep.subr.mxu0 0.0
        %724 = vmatpush2.msra.mxu0 0.0
        %725 = vmatprep.subr.mxu0 0.0
        %726 = vmatpush2.msra.mxu0 0.0
        %727 = vmatprep.subr.mxu0 0.0
        %728 = vmatpush2.msra.mxu0 0.0
        %729 = vmatprep.subr.mxu0 0.0
        %730 = vmatpush2.msra.mxu0 0.0
        %731 = vmatprep.subr.mxu0 0.0
        %732 = vmatpush2.msra.mxu0 0.0
        %733 = vmatprep.subr.mxu0 0.0
        %734 = vmatpush2.msra.mxu0 0.0
        %735 = vmatprep.mubr.f32.mxu0 0.0
        %736 = vmatmul.mubr.f32.gmra.mxu0 %v624
        %v737 = vpop.f32.mrf.mxu0
        %v738 = vadd.f32 %v620, %v737
        %v739 = vpop.f32.mrf.mxu0
        %740 = vmatprep.mubr.f32.mxu0 0.0
        %741 = vmatmul.mubr.f32.gmra.mxu0 %v627
        %v742 = vpop.f32.mrf.mxu0
        %v743 = vadd.f32 %v620, %v742
        %v744 = vpop.f32.mrf.mxu0
        %745 = vmatprep.mubr.f32.mxu0 0.0
        %746 = vmatmul.mubr.f32.gmra.mxu0 %v630
        %v747 = vpop.f32.mrf.mxu0
        %v748 = vadd.f32 %v620, %v747
        %v749 = vpop.f32.mrf.mxu0
        %750 = vmatprep.mubr.f32.mxu0 0.0
        %751 = vmatmul.mubr.f32.gmra.mxu0 %v633
        %v752 = vpop.f32.mrf.mxu0
        %v753 = vadd.f32 %v620, %v752
        %v754 = vpop.f32.mrf.mxu0
        %755 = vmatprep.mubr.f32.mxu0 0.0
        %756 = vmatmul.mubr.f32.gmra.mxu0 %v636
        %v757 = vpop.f32.mrf.mxu0
        %v758 = vadd.f32 %v620, %v757
        %v759 = vpop.f32.mrf.mxu0
        %760 = vmatprep.mubr.f32.mxu0 0.0
        %761 = vmatmul.mubr.f32.gmra.mxu0 %v639
        %v762 = vpop.f32.mrf.mxu0
        %v763 = vadd.f32 %v620, %v762
        %v764 = vpop.f32.mrf.mxu0
        %765 = vmatprep.mubr.f32.mxu0 0.0
        %766 = vmatmul.mubr.f32.gmra.mxu0 %v642
        %v767 = vpop.f32.mrf.mxu0
        %v768 = vadd.f32 %v620, %v767
        %v769 = vpop.f32.mrf.mxu0
        %770 = vmatprep.mubr.f32.mxu0 0.0
        %771 = vmatmul.mubr.f32.gmra.mxu0 %v645
        %v772 = vpop.f32.mrf.mxu0
        %v773 = vadd.f32 %v620, %v772
        %v774 = vpop.f32.mrf.mxu0
        %775 = vmatprep.mubr.f32.mxu0 0.0
        %776 = vmatmul.mubr.f32.gmra.mxu0 %v648
        %v777 = vpop.f32.mrf.mxu0
        %v778 = vadd.f32 %v620, %v777
        %v779 = vpop.f32.mrf.mxu0
        %780 = vmatprep.mubr.f32.mxu0 0.0
        %781 = vmatmul.mubr.f32.gmra.mxu0 %v651
        %v782 = vpop.f32.mrf.mxu0
        %v783 = vadd.f32 %v620, %v782
        %v784 = vpop.f32.mrf.mxu0
        %785 = vmatprep.mubr.f32.mxu0 0.0
        %786 = vmatmul.mubr.f32.gmra.mxu0 %v654
        %v787 = vpop.f32.mrf.mxu0
        %v788 = vadd.f32 %v620, %v787
        %v789 = vpop.f32.mrf.mxu0
        %790 = vmatprep.mubr.f32.mxu0 0.0
        %791 = vmatmul.mubr.f32.gmra.mxu0 %v657
        %v792 = vpop.f32.mrf.mxu0
        %v793 = vadd.f32 %v620, %v792
        %v794 = vpop.f32.mrf.mxu0
        %795 = vmatprep.mubr.f32.mxu0 0.0
        %796 = vmatmul.mubr.f32.gmra.mxu0 %v660
        %v797 = vpop.f32.mrf.mxu0
        %v798 = vadd.f32 %v620, %v797
        %v799 = vpop.f32.mrf.mxu0
        %800 = vmatprep.mubr.f32.mxu0 0.0
        %801 = vmatmul.mubr.f32.gmra.mxu0 %v663
        %v802 = vpop.f32.mrf.mxu0
        %v803 = vadd.f32 %v620, %v802
        %v804 = vpop.f32.mrf.mxu0
        %805 = vmatprep.mubr.f32.mxu0 0.0
        %806 = vmatmul.mubr.f32.gmra.mxu0 %v666
        %v807 = vpop.f32.mrf.mxu0
        %v808 = vadd.f32 %v620, %v807
        %v809 = vpop.f32.mrf.mxu0
        %810 = vmatprep.mubr.f32.mxu0 0.0
        %811 = vmatmul.mubr.f32.gmra.mxu0 %v669
        %v812 = vpop.f32.mrf.mxu0
        %v813 = vadd.f32 %v620, %v812
        %v814 = vpop.f32.mrf.mxu0
        %815 = vdwg.mxu0
        %vm816 = vcmp.gt.f32.partialorder %v738, 0.0
        %vm817 = vcmp.gt.f32.partialorder %v743, 0.0
        %vm818 = vcmp.gt.f32.partialorder %v748, 0.0
        %vm819 = vcmp.gt.f32.partialorder %v753, 0.0
        %vm820 = vcmp.gt.f32.partialorder %v758, 0.0
        %vm821 = vcmp.gt.f32.partialorder %v763, 0.0
        %vm822 = vcmp.gt.f32.partialorder %v768, 0.0
        %vm823 = vcmp.gt.f32.partialorder %v773, 0.0
        %vm824 = vcmp.gt.f32.partialorder %v778, 0.0
        %vm825 = vcmp.gt.f32.partialorder %v783, 0.0
        %vm826 = vcmp.gt.f32.partialorder %v788, 0.0
        %vm827 = vcmp.gt.f32.partialorder %v793, 0.0
        %vm828 = vcmp.gt.f32.partialorder %v798, 0.0
        %vm829 = vcmp.gt.f32.partialorder %v803, 0.0
        %vm830 = vcmp.gt.f32.partialorder %v808, 0.0
        %vm831 = vcmp.gt.f32.partialorder %v813, 0.0
        %v832 = vmul.f32 %v738, 1.442695
        %v833 = vpow.pop %v832
        %v834 = vmul.f32 %v743, 1.442695
        %v835 = vpow.pop %v834
        %v836 = vmul.f32 %v748, 1.442695
        %v837 = vpow.pop %v836
        %v838 = vmul.f32 %v753, 1.442695
        %v839 = vpow.pop %v838
        %v840 = vmul.f32 %v758, 1.442695
        %v841 = vpow.pop %v840
        %v842 = vmul.f32 %v763, 1.442695
        %v843 = vpow.pop %v842
        %v844 = vmul.f32 %v768, 1.442695
        %v845 = vpow.pop %v844
        %v846 = vmul.f32 %v773, 1.442695
        %v847 = vpow.pop %v846
        %v848 = vmul.f32 %v778, 1.442695
        %v849 = vpow.pop %v848
        %v850 = vmul.f32 %v783, 1.442695
        %v851 = vpow.pop %v850
        %v852 = vmul.f32 %v788, 1.442695
        %v853 = vpow.pop %v852
        %v854 = vmul.f32 %v793, 1.442695
        %v855 = vpow.pop %v854
        %v856 = vmul.f32 %v798, 1.442695
        %v857 = vpow.pop %v856
        %v858 = vmul.f32 %v803, 1.442695
        %v859 = vpow.pop %v858
        %v860 = vmul.f32 %v808, 1.442695
        %v861 = vpow.pop %v860
        %v862 = vmul.f32 %v813, 1.442695
        %v863 = vpow.pop %v862
        %v864 = vsub.f32 %v833, 1.0
        %v865 = vsub.f32 %v835, 1.0
        %v866 = vsub.f32 %v837, 1.0
        %v867 = vsub.f32 %v839, 1.0
        %v868 = vsub.f32 %v841, 1.0
        %v869 = vsub.f32 %v843, 1.0
        %v870 = vsub.f32 %v845, 1.0
        %v871 = vsub.f32 %v847, 1.0
        %v872 = vsub.f32 %v849, 1.0
        %v873 = vsub.f32 %v851, 1.0
        %v874 = vsub.f32 %v853, 1.0
        %v875 = vsub.f32 %v855, 1.0
        %v876 = vsub.f32 %v857, 1.0
        %v877 = vsub.f32 %v859, 1.0
        %v878 = vsub.f32 %v861, 1.0
        %v879 = vsub.f32 %v863, 1.0
        %v880 = vmul.f32 %v864, 1.6732632
        %v881 = vmul.f32 %v865, 1.6732632
        %v882 = vmul.f32 %v866, 1.6732632
        %v883 = vmul.f32 %v867, 1.6732632
        %v884 = vmul.f32 %v868, 1.6732632
        %v885 = vmul.f32 %v869, 1.6732632
        %v886 = vmul.f32 %v870, 1.6732632
        %v887 = vmul.f32 %v871, 1.6732632
        %v888 = vmul.f32 %v872, 1.6732632
        %v889 = vmul.f32 %v873, 1.6732632
        %v890 = vmul.f32 %v874, 1.6732632
        %v891 = vmul.f32 %v875, 1.6732632
        %v892 = vmul.f32 %v876, 1.6732632
        %v893 = vmul.f32 %v877, 1.6732632
        %v894 = vmul.f32 %v878, 1.6732632
        %v895 = vmul.f32 %v879, 1.6732632
        %v896 = vsel %vm816, %v738, %v880
        %v897 = vsel %vm817, %v743, %v881
        %v898 = vsel %vm818, %v748, %v882
        %v899 = vsel %vm819, %v753, %v883
        %v900 = vsel %vm820, %v758, %v884
        %v901 = vsel %vm821, %v763, %v885
        %v902 = vsel %vm822, %v768, %v886
        %v903 = vsel %vm823, %v773, %v887
        %v904 = vsel %vm824, %v778, %v888
        %v905 = vsel %vm825, %v783, %v889
        %v906 = vsel %vm826, %v788, %v890
        %v907 = vsel %vm827, %v793, %v891
        %v908 = vsel %vm828, %v798, %v892
        %v909 = vsel %vm829, %v803, %v893
        %v910 = vsel %vm830, %v808, %v894
        %v911 = vsel %vm831, %v813, %v895
        %v912 = vmul.f32 %v896, 1.050701
        %v913 = vmul.f32 %v897, 1.050701
        %v914 = vmul.f32 %v898, 1.050701
        %v915 = vmul.f32 %v899, 1.050701
        %v916 = vmul.f32 %v900, 1.050701
        %v917 = vmul.f32 %v901, 1.050701
        %v918 = vmul.f32 %v902, 1.050701
        %v919 = vmul.f32 %v903, 1.050701
        %v920 = vmul.f32 %v904, 1.050701
        %v921 = vmul.f32 %v905, 1.050701
        %v922 = vmul.f32 %v906, 1.050701
        %v923 = vmul.f32 %v907, 1.050701
        %v924 = vmul.f32 %v908, 1.050701
        %v925 = vmul.f32 %v909, 1.050701
        %v926 = vmul.f32 %v910, 1.050701
        %v927 = vmul.f32 %v911, 1.050701
        %v928 = vld [vmem:[%s5] sm:$0x1]
        %v929 = vld [vmem:[#allocation2] sm:$0x1]
        %931 = vset.pattern.permute.xlu0 0
        %932 = vperm.xlu0 %931, %v929
        %v933 = vpop.permute.xlu0 %932
        %v935 = vlaneseq
        %v936 = vshrl.u32 %v935, 7
        %v937 = vsub.s32 0, %v936
        %v938 = vrot.slane %v933, %v937
        %v940 = vsel %vm622, %v928, 0
        %v943 = vsel %vm622, %v912, 0
        %v946 = vsel %vm622, %v913, 0
        %v949 = vsel %vm622, %v914, 0
        %v952 = vsel %vm622, %v915, 0
        %v955 = vsel %vm622, %v916, 0
        %v958 = vsel %vm622, %v917, 0
        %v961 = vsel %vm622, %v918, 0
        %v964 = vsel %vm622, %v919, 0
        %v967 = vsel %vm622, %v920, 0
        %v970 = vsel %vm622, %v921, 0
        %v973 = vsel %vm622, %v922, 0
        %v976 = vsel %vm622, %v923, 0
        %v979 = vsel %vm622, %v924, 0
        %v982 = vsel %vm622, %v925, 0
        %v985 = vsel %vm622, %v926, 0
        %v988 = vsel %vm622, %v927, 0
        %990 = vmatprep.subr.mxu0 0.0
        %991 = vmatpush1.xpose.msra.mxu0 %v988
        %992 = vmatprep.subr.mxu0 0.0
        %993 = vmatpush1.xpose.msra.mxu0 %v985
        %994 = vmatprep.subr.mxu0 0.0
        %995 = vmatpush1.xpose.msra.mxu0 %v982
        %996 = vmatprep.subr.mxu0 0.0
        %997 = vmatpush1.xpose.msra.mxu0 %v979
        %998 = vmatprep.subr.mxu0 0.0
        %999 = vmatpush1.xpose.msra.mxu0 %v976
        %1000 = vmatprep.subr.mxu0 0.0
        %1001 = vmatpush1.xpose.msra.mxu0 %v973
        %1002 = vmatprep.subr.mxu0 0.0
        %1003 = vmatpush1.xpose.msra.mxu0 %v970
        %1004 = vmatprep.subr.mxu0 0.0
        %1005 = vmatpush1.xpose.msra.mxu0 %v967
        %1006 = vmatprep.subr.mxu0 0.0
        %1007 = vmatpush1.xpose.msra.mxu0 %v964
        %1008 = vmatprep.subr.mxu0 0.0
        %1009 = vmatpush1.xpose.msra.mxu0 %v961
        %1010 = vmatprep.subr.mxu0 0.0
        %1011 = vmatpush1.xpose.msra.mxu0 %v958
        %1012 = vmatprep.subr.mxu0 0.0
        %1013 = vmatpush1.xpose.msra.mxu0 %v955
        %1014 = vmatprep.subr.mxu0 0.0
        %1015 = vmatpush1.xpose.msra.mxu0 %v952
        %1016 = vmatprep.subr.mxu0 0.0
        %1017 = vmatpush1.xpose.msra.mxu0 %v949
        %1018 = vmatprep.subr.mxu0 0.0
        %1019 = vmatpush1.xpose.msra.mxu0 %v946
        %1020 = vmatprep.subr.mxu0 0.0
        %1021 = vmatpush1.xpose.msra.mxu0 %v943
        %1022 = vmatprep.subr.mxu0 0.0
        %1023 = vmatpush2.xpose.msra.mxu0 0.0
        %1024 = vmatprep.subr.mxu0 0.0
        %1025 = vmatpush2.xpose.msra.mxu0 0.0
        %1026 = vmatprep.subr.mxu0 0.0
        %1027 = vmatpush2.xpose.msra.mxu0 0.0
        %1028 = vmatprep.subr.mxu0 0.0
        %1029 = vmatpush2.xpose.msra.mxu0 0.0
        %1030 = vmatprep.subr.mxu0 0.0
        %1031 = vmatpush2.xpose.msra.mxu0 0.0
        %1032 = vmatprep.subr.mxu0 0.0
        %1033 = vmatpush2.xpose.msra.mxu0 0.0
        %1034 = vmatprep.subr.mxu0 0.0
        %1035 = vmatpush2.xpose.msra.mxu0 0.0
        %1036 = vmatprep.subr.mxu0 0.0
        %1037 = vmatpush2.xpose.msra.mxu0 0.0
        %1038 = vmatprep.subr.mxu0 0.0
        %1039 = vmatpush2.xpose.msra.mxu0 0.0
        %1040 = vmatprep.subr.mxu0 0.0
        %1041 = vmatpush2.xpose.msra.mxu0 0.0
        %1042 = vmatprep.subr.mxu0 0.0
        %1043 = vmatpush2.xpose.msra.mxu0 0.0
        %1044 = vmatprep.subr.mxu0 0.0
        %1045 = vmatpush2.xpose.msra.mxu0 0.0
        %1046 = vmatprep.subr.mxu0 0.0
        %1047 = vmatpush2.xpose.msra.mxu0 0.0
        %1048 = vmatprep.subr.mxu0 0.0
        %1049 = vmatpush2.xpose.msra.mxu0 0.0
        %1050 = vmatprep.subr.mxu0 0.0
        %1051 = vmatpush2.xpose.msra.mxu0 0.0
        %1052 = vmatprep.subr.mxu0 0.0
        %1053 = vmatpush2.xpose.msra.mxu0 0.0
        %1054 = vmatprep.mubr.f32.mxu0 0.0
        %1055 = vmatmul.mubr.f32.gmra.mxu0 %v940
        %v1056 = vpop.f32.mrf.mxu0
        %v1057 = vadd.f32 %v938, %v1056
        %v1058 = vpop.f32.mrf.mxu0
        %1059 = vdwg.mxu0
        %v1060 = vsub.f32 0.0, %v1057
        %v1061 = vmul.f32 %v1060, 1.442695
        %v1062 = vpow.pop %v1061
        %v1063 = vadd.f32 %v1062, 1.0
        %v1064 = vrcp.pop %v1063
        %v1065 = vmul.f32 1.0, %v1064
        %1066 = vst [vmem:[%s273] sm:$0x1] %v1065
        %s1067 = sand.u32 %s183, 1
        %s1068 = scalar_lea.sflag [#allocation4], %s1067
        %s1069 = sand.u32 %s183, 1
        %s1070 = scalar_lea.vmem [#allocation3], %s1069
        // Predicated region
        $region49: #{tpu_custom_call.1} parent=47 // pred_check
          %p1071 = pneg %p193
        $region50: #{tpu_custom_call.1} parent=47 // pred_check_branch
          %1073 = sbr.rel (%p1071) target = $region52
        $region51: #{tpu_custom_call.1} parent=47 // pred_region
          %s1075 = ssub.s32 16, 16
          %1076 = vsyncadd %s1068, %s1075
          %s1077 = smul.addr %s23, 16
          %s1078 = scalar_lea.hbm %s7, %s1077
          %s1080 = sshll.u32 %s1070, 4
          %s1081 = int_to_ptr.vmem [resolvable:$true] %s1080
          %1083 = dma.vmem_to_hbm [thread:$0]  %s1081, 16, %s1078, %s1068
        $region52: #{tpu_custom_call.1} parent=47 // pred_fallthru
          _
      $region48: #{tpu_custom_call.1} parent=5 // pred_fallthru
        _
      %p1084 = scmp.le.s32.totalorder 2, %s18
      // Predicated region
      $region53: #{tpu_custom_call.1} parent=5 // pred_check
        %p1085 = pneg %p1084
      $region54: #{tpu_custom_call.1} parent=5 // pred_check_branch
        %1087 = sbr.rel (%p1085) target = $region56
      $region55: #{tpu_custom_call.1} parent=5 // pred_region
        %s1088 = ssub.s32 %s18, 2
        // Predicated region
        $region57: #{tpu_custom_call.1} parent=55 // pred_check
          %p1089 = pneg %p199
        $region58: #{tpu_custom_call.1} parent=55 // pred_check_branch
          %1091 = sbr.rel (%p1089) target = $region60
        $region59: #{tpu_custom_call.1} parent=55 // pred_region
          %s1092 = sand.u32 %s184, 1
          %s1093 = scalar_lea.sflag [#allocation4], %s1092
          %s1094 = sand.u32 %s184, 1
          %s1095 = scalar_lea.vmem [#allocation3], %s1094
          %1096 = dma.done %s1093, 16
        $region60: #{tpu_custom_call.1} parent=55 // pred_fallthru
          _
      $region56: #{tpu_custom_call.1} parent=5 // pred_fallthru
        _
    $region6: #{tpu_custom_call.1} parent=1 // loop_footer
      %s22 = sadd.s32 1, %s18
    $region7: #{tpu_custom_call.1} parent=1 // loop_footer_branch
      %17 = sbr.rel target = $region3
    $region8: #{tpu_custom_call.1} parent=1 // loop_exit
      _
    %1097 = vsyncpa [#allocation4], 1
    %s1098 = scalar_lea.sflag [#allocation4], 1
    %1099 = vsyncpa %s1098, 1

</llo_original>
